<compile_context>
chip_gen: v6e
topology: v6e:2x2x1
jax: 0.10.0
libtpu: 0.0.40
codegen_flags: <defaults>
</compile_context>

<pallas_src>
import jax
import jax.numpy as jnp
from jax import lax
from jax.experimental import pallas as pl
from jax.experimental.pallas import tpu as pltpu

CLAS = 100         # number of classes (matches `clas` in the reference)
C_PAD = 104        # classes padded to the next multiple of 8 sublanes
CHUNK = 128        # lanes processed register-resident per inner-loop step
MAX_BN = 2048      # batch-tile cap per grid step (block is ~0.85 MiB at 2048)
RAT_AVG = 0.01     # matches `rat_avg` in the reference
NEG_PAD = -1e30    # pad logit: softmax mass of padded classes is exactly 0


def _hb_kernel(yp_ref, lab_ref, out_ref):
    # yp_ref : (C_PAD, BN) logits  -- classes on sublanes, batch on lanes
    # lab_ref: (2, BN) int32       -- row 0 = y (noisy label), row 1 = y_cs (clean label)
    # out_ref: (16, BN) f32        -- lane-dense per-sample result rows (see wrapper)
    cpad, bn = yp_ref.shape
    n_chunks = bn // CHUNK

    # hoisted loop-invariant: class index per sublane (JAX does not CSE broadcasts)
    row = lax.broadcasted_iota(jnp.int32, (cpad, CHUNK), 0)

    @pl.loop(0, n_chunks)
    def _(c):
        c0 = pl.multiple_of(c * CHUNK, CHUNK)
        lanes = pl.ds(c0, CHUNK)
        logits = yp_ref[:, lanes].astype(jnp.float32)               # (C_PAD, CHUNK)
        labels = lab_ref[:, lanes]                                   # (2, CHUNK)
        y = labels[0:1, :]
        ycs = labels[1:2, :]

        # ---- numerically-stable softmax pieces (softmax never materialized) ----
        m = jnp.max(logits, axis=0, keepdims=True)                   # (1, CHUNK)
        is_max = logits == m
        idx1 = jnp.min(jnp.where(is_max, row, cpad), axis=0, keepdims=True)   # max1_mun

        # ---- label-logit gathers (labels < 100, padded classes never match) ----
        logit_y = jnp.sum(jnp.where(row == y, logits, 0.0), axis=0, keepdims=True)
        logit_ycs = jnp.sum(jnp.where(row == ycs, logits, 0.0), axis=0, keepdims=True)

        e = jnp.exp(logits - m)                                       # pad classes -> 0
        denom = jnp.sum(e, axis=0, keepdims=True)
        inv_denom = pl.reciprocal(denom, approx=False)                # exact 1/denom

        # ---- iterative top-11 on UNNORMALIZED e (ordering is scale-invariant).
        # Rank 1 is free: e at the argmax is exp(0)=1, so max_1 == inv_denom.
        # Exact float ties are removed together (tie-break can differ from
        # torch.kthvalue only when bit-identical duplicates occur).
        work = jnp.where(is_max, -1.0, e)
        peel = []
        for k in range(10):
            v = jnp.max(work, axis=0, keepdims=True)
            peel.append(v)
            if k < 9:
                work = jnp.where(work == v, -1.0, work)

        max_1 = inv_denom
        max_2 = peel[0] * inv_denom
        max_3 = peel[1] * inv_denom
        max_4 = peel[2] * inv_denom
        max_5 = peel[3] * inv_denom
        max_7 = peel[5] * inv_denom
        max_10 = peel[9] * inv_denom          # kthvalue(clas - 10) == 11th largest

        fy = jnp.exp(logit_y - m) * inv_denom
        fy_cs = jnp.exp(logit_ycs - m) * inv_denom

        s = (fy < RAT_AVG).astype(jnp.int32)                          # (1, CHUNK)
        one = jnp.ones_like(s)

        # ---- bootstrapped label + per-row cross entropy (reduction='none');
        #      logits[idx1] == m, so no second full-tile gather is needed.
        z1 = s * idx1 + (one - s) * y
        logit_z1 = jnp.where(s == 1, m, logit_y)
        ce = jnp.log(denom) + m - logit_z1                            # = -log_softmax[z1]

        # ---- per-row terms for tk / tk2 / fy_cs_num ----
        cond = jnp.logical_and(max_1 / max_2 > max_2 / max_10, fy < max_3).astype(jnp.int32)
        eq_y = (idx1 == y).astype(jnp.int32)
        eq_ycs = (idx1 == ycs).astype(jnp.int32)
        tk2_row = s * cond + (one - s) * eq_y
        tk_row = eq_ycs * tk2_row
        ge_row = (fy_cs >= max_10).astype(jnp.int32)

        # ---- single lane-dense 16-row output slab (integer rows stored as exact f32)
        out_ref[0:1, lanes] = max_1
        out_ref[1:2, lanes] = max_2
        out_ref[2:3, lanes] = max_3
        out_ref[3:4, lanes] = max_4
        out_ref[4:5, lanes] = max_5
        out_ref[5:6, lanes] = max_7
        out_ref[6:7, lanes] = max_10
        out_ref[7:8, lanes] = fy
        out_ref[8:9, lanes] = fy_cs
        out_ref[9:10, lanes] = ce
        out_ref[10:11, lanes] = idx1.astype(jnp.float32)
        out_ref[11:12, lanes] = s.astype(jnp.float32)
        out_ref[12:13, lanes] = z1.astype(jnp.float32)
        out_ref[13:14, lanes] = tk_row.astype(jnp.float32)
        out_ref[14:15, lanes] = tk2_row.astype(jnp.float32)
        out_ref[15:16, lanes] = ge_row.astype(jnp.float32)


def _round_up(x, m):
    return (x + m - 1) // m * m


def _prefer_two_grid_steps():
    """Only v7x has 2 TensorCores sharing the grid's parallel axis."""
    try:
        kind = jax.devices()[0].device_kind.lower()
    except Exception:
        return False
    return "7" in kind


def _choose_bn(n_pad, max_bn=MAX_BN):
    """Largest CHUNK-multiple tile <= max_bn that divides n_pad; on v7x prefer >= 2
    grid steps (keeps both TensorCores busy); on v5e/v6e a single block is best."""
    cands = [b for b in range(CHUNK, min(max_bn, n_pad) + CHUNK, CHUNK) if n_pad % b == 0]
    if _prefer_two_grid_steps():
        two = [b for b in cands if n_pad // b >= 2]
        if two:
            return max(two)
    return max(cands)


def hard_bootstrapping_loss1(y_pred, y, y_cs, y_val, epoch_num=0, beta=0.8, reduce=True):
    """Mirrors HardBootstrappingLoss1.forward (returned values only; prints omitted)."""
    N, C = y_pred.shape
    assert C == CLAS
    n_pad = _round_up(N, CHUNK)
    bn = _choose_bn(n_pad)

    # Pad classes to 104 with a huge negative (softmax mass exactly 0), pad the batch to
    # a lane multiple with zero logits, and transpose so the batch is lane-dense.
    # TODO(synk): in the full model the classifier matmul should emit y_pred directly as
    # (C, N) (swap MXU operands) so this pad+transpose HBM round trip disappears.
    yp = jnp.pad(y_pred, ((0, n_pad - N), (0, 0)))
    yp_t = jnp.pad(yp, ((0, 0), (0, C_PAD - C)), constant_values=NEG_PAD).T  # (C_PAD, n_pad)
    labels = jnp.stack([jnp.pad(y.astype(jnp.int32), (0, n_pad - N)),
                        jnp.pad(y_cs.astype(jnp.int32), (0, n_pad - N))], axis=0)  # (2, n_pad)

    out = pl.pallas_call(
        _hb_kernel,
        out_shape=jax.ShapeDtypeStruct((16, n_pad), jnp.float32),
        grid_spec=pltpu.PrefetchScalarGridSpec(
            num_scalar_prefetch=0,
            grid=(n_pad // bn,),
            in_specs=[
                pl.BlockSpec((C_PAD, bn), lambda i: (0, i)),
                pl.BlockSpec((2, bn), lambda i: (0, i)),
            ],
            out_specs=pl.BlockSpec((16, bn), lambda i: (0, i)),
        ),
        compiler_params=pltpu.CompilerParams(dimension_semantics=("parallel",)),
    )(yp_t, labels)

    out = out[:, :N]
    max_1, max_2, max_3, max_4, max_5, max_7, max_10, fy, fy_cs, ce = (
        out[k] for k in range(10))
    ints = out[10:16].astype(jnp.int32)     # exact: every integer row value is < 2**24
    idx1, s, z1, tk_row, tk2_row, ge_row = (ints[k] for k in range(6))

    # computed in the reference only for printed diagnostics
    _ = jnp.max(y_val, axis=1)
    # TODO(synk): the PyTorch forward also builds a noisy label vector z1_s via a
    # host-side numpy RNG (noisify_multiclass_symmetric) purely for printed
    # diagnostics; it does not affect any returned value, so it is omitted.

    y_i32 = y.astype(jnp.int32)
    ones = jnp.ones_like(s)
    if epoch_num > 2000:
        bootstrap = ce * max_1
    else:
        if epoch_num > 50:
            y_p_s = (max_1 < 0.95).astype(jnp.int32)
            y_local = ones - s * y_p_s - (idx1 != y_i32).astype(jnp.int32) * (ones - s)
        else:
            y_p_s = (max_1 < 1.0).astype(jnp.int32)
            y_local = ones - s * y_p_s
        bootstrap = ce * y_local.astype(jnp.float32)

    if not reduce:
        return bootstrap

    loss = jnp.mean(bootstrap)
    fy_cs_num = jnp.sum(ge_row)
    tk = jnp.sum(tk_row)
    tk2 = jnp.sum(tk2_row)
    return (loss, fy_cs_num, max_1, max_2, max_3, max_4, max_5, idx1, tk, tk2, z1, z1, s)


if __name__ == "__main__":
    key = jax.random.PRNGKey(0)
    k1, k2, k3, k4 = jax.random.split(key, 4)
    N, C = 200, CLAS                      # deliberately not a multiple of 128 (pads to 256)
    y_pred = jax.random.normal(k1, (N, C), dtype=jnp.float32) * 3.0
    y = jax.random.randint(k2, (N,), 0, C, dtype=jnp.int32)
    y_cs = jax.random.randint(k3, (N,), 0, C, dtype=jnp.int32)
    y_val = jax.random.uniform(k4, (N, C), dtype=jnp.float32)

    out = hard_bootstrapping_loss1(y_pred, y, y_cs, y_val, epoch_num=0)
    out = jax.tree_util.tree_map(jax.block_until_ready, out)

    # --- plain-JAX reference check of the returned values ---
    soft = jax.nn.softmax(y_pred, axis=1)
    logsoft = jax.nn.log_softmax(y_pred, axis=1)
    top_vals, top_idx = jax.lax.top_k(soft, 11)
    fy_ref = soft[jnp.arange(N), y]
    s_ref = (fy_ref < RAT_AVG).astype(jnp.int32)
    z1_ref = s_ref * top_idx[:, 0].astype(jnp.int32) + (1 - s_ref) * y
    ce_ref = -logsoft[jnp.arange(N), z1_ref]
    y_local_ref = 1 - s_ref * (top_vals[:, 0] < 1.0).astype(jnp.int32)
    loss_ref = jnp.mean(ce_ref * y_local_ref.astype(jnp.float32))

    assert jnp.allclose(out[0], loss_ref, rtol=1e-5, atol=1e-5)         # loss
    assert jnp.allclose(out[2], top_vals[:, 0], rtol=1e-5, atol=1e-6)   # max_1
    assert jnp.allclose(out[3], top_vals[:, 1], rtol=1e-5, atol=1e-6)   # max_2
    assert jnp.allclose(out[4], top_vals[:, 2], rtol=1e-5, atol=1e-6)   # max_3
    assert jnp.allclose(out[6], top_vals[:, 4], rtol=1e-5, atol=1e-6)   # max_5
    assert jnp.array_equal(out[7], top_idx[:, 0].astype(jnp.int32))     # max1_mun
    assert jnp.array_equal(out[10], z1_ref)                             # z1
    assert jnp.array_equal(out[12], s_ref)                              # s

    print("KERNEL_OK")
</pallas_src>

<mosaic_0001>
module attributes {stable_mosaic.version = 11 : i64} {
  func.func @_hb_kernel(%arg0: i32, %arg1: memref<104x256xf32, #tpu.memory_space<vmem>>, %arg2: memref<2x256xi32, #tpu.memory_space<vmem>>, %arg3: memref<16x256xf32, #tpu.memory_space<vmem>>) attributes {dimension_semantics = [#tpu.dimension_semantics<parallel>], iteration_bounds = array<i64: 1>, scalar_prefetch = 0 : i64, scratch_operands = 0 : i64, tpu.core_type = #tpu.core_type<tc>, window_params = [{transform_indices = @transform_0, window_bounds = array<i64: 104, 256>}, {transform_indices = @transform_1, window_bounds = array<i64: 2, 256>}, {transform_indices = @transform_2, window_bounds = array<i64: 16, 256>}]} {
    %0 = tpu.iota {dimensions = array<i32: 0>} : vector<104x128xi32>
    %c0_i32 = arith.constant 0 : i32
    %c2_i32 = arith.constant 2 : i32
    %1 = arith.addi %c0_i32, %c2_i32 : i32
    %c1_i32 = arith.constant 1 : i32
    scf.for %arg4 = %c0_i32 to %1 step %c1_i32  : i32 {
      %c1_i32_1 = arith.constant 1 : i32
      %2 = arith.muli %arg4, %c1_i32_1 : i32
      %c0_i32_2 = arith.constant 0 : i32
      %3 = arith.addi %c0_i32_2, %2 : i32
      %c128_i32 = arith.constant 128 : i32
      %4 = arith.muli %3, %c128_i32 : i32
      %5 = tpu.assume_multiple %4, 128 : i32
      %c0 = arith.constant 0 : index
      %6 = arith.index_cast %5 : i32 to index
      %7 = vector.load %arg1[%c0, %6] : memref<104x256xf32, #tpu.memory_space<vmem>>, vector<104x128xf32>
      %c0_3 = arith.constant 0 : index
      %8 = arith.index_cast %5 : i32 to index
      %9 = vector.load %arg2[%c0_3, %8] : memref<2x256xi32, #tpu.memory_space<vmem>>, vector<2x128xi32>
      %10 = vector.extract_strided_slice %9 {offsets = [0, 0], sizes = [1, 128], strides = [1, 1]} : vector<2x128xi32> to vector<1x128xi32>
      %11 = vector.extract_strided_slice %9 {offsets = [1, 0], sizes = [1, 128], strides = [1, 1]} : vector<2x128xi32> to vector<1x128xi32>
      %cst = arith.constant dense<0xFF800000> : vector<128xf32>
      %12 = vector.multi_reduction <maximumf>, %7, %cst [0] : vector<104x128xf32> to vector<128xf32>
      %13 = vector.shape_cast %12 : vector<128xf32> to vector<1x128xf32>
      %14 = vector.broadcast %13 : vector<1x128xf32> to vector<104x128xf32>
      %15 = arith.cmpf oeq, %7, %14 : vector<104x128xf32>
      %c104_i32 = arith.constant 104 : i32
      %16 = vector.broadcast %c104_i32 : i32 to vector<104x128xi32>
      %17 = arith.select %15, %0, %16 : vector<104x128xi1>, vector<104x128xi32>
      %cst_4 = arith.constant dense<2147483647> : vector<128xi32>
      %18 = vector.multi_reduction <minsi>, %17, %cst_4 [0] : vector<104x128xi32> to vector<128xi32>
      %19 = vector.shape_cast %18 : vector<128xi32> to vector<1x128xi32>
      %20 = vector.broadcast %10 : vector<1x128xi32> to vector<104x128xi32>
      %21 = arith.cmpi eq, %0, %20 : vector<104x128xi32>
      %cst_5 = arith.constant 0.000000e+00 : f32
      %22 = vector.broadcast %cst_5 : f32 to vector<104x128xf32>
      %23 = arith.select %21, %7, %22 : vector<104x128xi1>, vector<104x128xf32>
      %cst_6 = arith.constant dense<0.000000e+00> : vector<128xf32>
      %24 = vector.multi_reduction <add>, %23, %cst_6 [0] : vector<104x128xf32> to vector<128xf32>
      %25 = vector.shape_cast %24 : vector<128xf32> to vector<1x128xf32>
      %26 = vector.broadcast %11 : vector<1x128xi32> to vector<104x128xi32>
      %27 = arith.cmpi eq, %0, %26 : vector<104x128xi32>
      %cst_7 = arith.constant 0.000000e+00 : f32
      %28 = vector.broadcast %cst_7 : f32 to vector<104x128xf32>
      %29 = arith.select %27, %7, %28 : vector<104x128xi1>, vector<104x128xf32>
      %cst_8 = arith.constant dense<0.000000e+00> : vector<128xf32>
      %30 = vector.multi_reduction <add>, %29, %cst_8 [0] : vector<104x128xf32> to vector<128xf32>
      %31 = vector.shape_cast %30 : vector<128xf32> to vector<1x128xf32>
      %32 = vector.broadcast %13 : vector<1x128xf32> to vector<104x128xf32>
      %33 = arith.subf %7, %32 : vector<104x128xf32>
      %34 = math.exp %33 : vector<104x128xf32>
      %cst_9 = arith.constant dense<0.000000e+00> : vector<128xf32>
      %35 = vector.multi_reduction <add>, %34, %cst_9 [0] : vector<104x128xf32> to vector<128xf32>
      %36 = vector.shape_cast %35 : vector<128xf32> to vector<1x128xf32>
      %37 = tpu.reciprocal %36 : vector<1x128xf32> -> vector<1x128xf32>
      %cst_10 = arith.constant -1.000000e+00 : f32
      %38 = vector.broadcast %cst_10 : f32 to vector<104x128xf32>
      %39 = arith.select %15, %38, %34 : vector<104x128xi1>, vector<104x128xf32>
      %cst_11 = arith.constant dense<0xFF800000> : vector<128xf32>
      %40 = vector.multi_reduction <maximumf>, %39, %cst_11 [0] : vector<104x128xf32> to vector<128xf32>
      %41 = vector.shape_cast %40 : vector<128xf32> to vector<1x128xf32>
      %42 = vector.broadcast %41 : vector<1x128xf32> to vector<104x128xf32>
      %43 = arith.cmpf oeq, %39, %42 : vector<104x128xf32>
      %cst_12 = arith.constant -1.000000e+00 : f32
      %44 = vector.broadcast %cst_12 : f32 to vector<104x128xf32>
      %45 = arith.select %43, %44, %39 : vector<104x128xi1>, vector<104x128xf32>
      %cst_13 = arith.constant dense<0xFF800000> : vector<128xf32>
      %46 = vector.multi_reduction <maximumf>, %45, %cst_13 [0] : vector<104x128xf32> to vector<128xf32>
      %47 = vector.shape_cast %46 : vector<128xf32> to vector<1x128xf32>
      %48 = vector.broadcast %47 : vector<1x128xf32> to vector<104x128xf32>
      %49 = arith.cmpf oeq, %45, %48 : vector<104x128xf32>
      %cst_14 = arith.constant -1.000000e+00 : f32
      %50 = vector.broadcast %cst_14 : f32 to vector<104x128xf32>
      %51 = arith.select %49, %50, %45 : vector<104x128xi1>, vector<104x128xf32>
      %cst_15 = arith.constant dense<0xFF800000> : vector<128xf32>
      %52 = vector.multi_reduction <maximumf>, %51, %cst_15 [0] : vector<104x128xf32> to vector<128xf32>
      %53 = vector.shape_cast %52 : vector<128xf32> to vector<1x128xf32>
      %54 = vector.broadcast %53 : vector<1x128xf32> to vector<104x128xf32>
      %55 = arith.cmpf oeq, %51, %54 : vector<104x128xf32>
      %cst_16 = arith.constant -1.000000e+00 : f32
      %56 = vector.broadcast %cst_16 : f32 to vector<104x128xf32>
      %57 = arith.select %55, %56, %51 : vector<104x128xi1>, vector<104x128xf32>
      %cst_17 = arith.constant dense<0xFF800000> : vector<128xf32>
      %58 = vector.multi_reduction <maximumf>, %57, %cst_17 [0] : vector<104x128xf32> to vector<128xf32>
      %59 = vector.shape_cast %58 : vector<128xf32> to vector<1x128xf32>
      %60 = vector.broadcast %59 : vector<1x128xf32> to vector<104x128xf32>
      %61 = arith.cmpf oeq, %57, %60 : vector<104x128xf32>
      %cst_18 = arith.constant -1.000000e+00 : f32
      %62 = vector.broadcast %cst_18 : f32 to vector<104x128xf32>
      %63 = arith.select %61, %62, %57 : vector<104x128xi1>, vector<104x128xf32>
      %cst_19 = arith.constant dense<0xFF800000> : vector<128xf32>
      %64 = vector.multi_reduction <maximumf>, %63, %cst_19 [0] : vector<104x128xf32> to vector<128xf32>
      %65 = vector.shape_cast %64 : vector<128xf32> to vector<1x128xf32>
      %66 = vector.broadcast %65 : vector<1x128xf32> to vector<104x128xf32>
      %67 = arith.cmpf oeq, %63, %66 : vector<104x128xf32>
      %cst_20 = arith.constant -1.000000e+00 : f32
      %68 = vector.broadcast %cst_20 : f32 to vector<104x128xf32>
      %69 = arith.select %67, %68, %63 : vector<104x128xi1>, vector<104x128xf32>
      %cst_21 = arith.constant dense<0xFF800000> : vector<128xf32>
      %70 = vector.multi_reduction <maximumf>, %69, %cst_21 [0] : vector<104x128xf32> to vector<128xf32>
      %71 = vector.shape_cast %70 : vector<128xf32> to vector<1x128xf32>
      %72 = vector.broadcast %71 : vector<1x128xf32> to vector<104x128xf32>
      %73 = arith.cmpf oeq, %69, %72 : vector<104x128xf32>
      %cst_22 = arith.constant -1.000000e+00 : f32
      %74 = vector.broadcast %cst_22 : f32 to vector<104x128xf32>
      %75 = arith.select %73, %74, %69 : vector<104x128xi1>, vector<104x128xf32>
      %cst_23 = arith.constant dense<0xFF800000> : vector<128xf32>
      %76 = vector.multi_reduction <maximumf>, %75, %cst_23 [0] : vector<104x128xf32> to vector<128xf32>
      %77 = vector.shape_cast %76 : vector<128xf32> to vector<1x128xf32>
      %78 = vector.broadcast %77 : vector<1x128xf32> to vector<104x128xf32>
      %79 = arith.cmpf oeq, %75, %78 : vector<104x128xf32>
      %cst_24 = arith.constant -1.000000e+00 : f32
      %80 = vector.broadcast %cst_24 : f32 to vector<104x128xf32>
      %81 = arith.select %79, %80, %75 : vector<104x128xi1>, vector<104x128xf32>
      %cst_25 = arith.constant dense<0xFF800000> : vector<128xf32>
      %82 = vector.multi_reduction <maximumf>, %81, %cst_25 [0] : vector<104x128xf32> to vector<128xf32>
      %83 = vector.shape_cast %82 : vector<128xf32> to vector<1x128xf32>
      %84 = vector.broadcast %83 : vector<1x128xf32> to vector<104x128xf32>
      %85 = arith.cmpf oeq, %81, %84 : vector<104x128xf32>
      %cst_26 = arith.constant -1.000000e+00 : f32
      %86 = vector.broadcast %cst_26 : f32 to vector<104x128xf32>
      %87 = arith.select %85, %86, %81 : vector<104x128xi1>, vector<104x128xf32>
      %cst_27 = arith.constant dense<0xFF800000> : vector<128xf32>
      %88 = vector.multi_reduction <maximumf>, %87, %cst_27 [0] : vector<104x128xf32> to vector<128xf32>
      %89 = vector.shape_cast %88 : vector<128xf32> to vector<1x128xf32>
      %90 = vector.broadcast %89 : vector<1x128xf32> to vector<104x128xf32>
      %91 = arith.cmpf oeq, %87, %90 : vector<104x128xf32>
      %cst_28 = arith.constant -1.000000e+00 : f32
      %92 = vector.broadcast %cst_28 : f32 to vector<104x128xf32>
      %93 = arith.select %91, %92, %87 : vector<104x128xi1>, vector<104x128xf32>
      %cst_29 = arith.constant dense<0xFF800000> : vector<128xf32>
      %94 = vector.multi_reduction <maximumf>, %93, %cst_29 [0] : vector<104x128xf32> to vector<128xf32>
      %95 = vector.shape_cast %94 : vector<128xf32> to vector<1x128xf32>
      %96 = arith.mulf %41, %37 : vector<1x128xf32>
      %97 = arith.mulf %47, %37 : vector<1x128xf32>
      %98 = arith.mulf %53, %37 : vector<1x128xf32>
      %99 = arith.mulf %59, %37 : vector<1x128xf32>
      %100 = arith.mulf %71, %37 : vector<1x128xf32>
      %101 = arith.mulf %95, %37 : vector<1x128xf32>
      %102 = arith.subf %25, %13 : vector<1x128xf32>
      %103 = math.exp %102 : vector<1x128xf32>
      %104 = arith.mulf %103, %37 : vector<1x128xf32>
      %105 = arith.subf %31, %13 : vector<1x128xf32>
      %106 = math.exp %105 : vector<1x128xf32>
      %107 = arith.mulf %106, %37 : vector<1x128xf32>
      %cst_30 = arith.constant 0.00999999977 : f32
      %108 = vector.broadcast %cst_30 : f32 to vector<1x128xf32>
      %109 = arith.cmpf olt, %104, %108 : vector<1x128xf32>
      %110 = arith.extui %109 : vector<1x128xi1> to vector<1x128xi32>
      %c1_i32_31 = arith.constant 1 : i32
      %111 = vector.broadcast %c1_i32_31 : i32 to vector<1x128xi32>
      %112 = arith.muli %110, %19 : vector<1x128xi32>
      %113 = arith.subi %111, %110 : vector<1x128xi32>
      %114 = arith.muli %113, %10 : vector<1x128xi32>
      %115 = arith.addi %112, %114 : vector<1x128xi32>
      %c1_i32_32 = arith.constant 1 : i32
      %116 = vector.broadcast %c1_i32_32 : i32 to vector<1x128xi32>
      %117 = arith.cmpi eq, %110, %116 : vector<1x128xi32>
      %118 = arith.select %117, %13, %25 : vector<1x128xi1>, vector<1x128xf32>
      %119 = math.log %36 : vector<1x128xf32>
      %120 = arith.addf %119, %13 : vector<1x128xf32>
      %121 = arith.subf %120, %118 : vector<1x128xf32>
      %122 = arith.divf %37, %96 : vector<1x128xf32>
      %123 = arith.divf %96, %101 : vector<1x128xf32>
      %124 = arith.cmpf ogt, %122, %123 : vector<1x128xf32>
      %125 = arith.cmpf olt, %104, %97 : vector<1x128xf32>
      %126 = arith.andi %124, %125 : vector<1x128xi1>
      %127 = arith.extui %126 : vector<1x128xi1> to vector<1x128xi32>
      %128 = arith.cmpi eq, %19, %10 : vector<1x128xi32>
      %129 = arith.extui %128 : vector<1x128xi1> to vector<1x128xi32>
      %130 = arith.cmpi eq, %19, %11 : vector<1x128xi32>
      %131 = arith.extui %130 : vector<1x128xi1> to vector<1x128xi32>
      %132 = arith.muli %110, %127 : vector<1x128xi32>
      %133 = arith.subi %111, %110 : vector<1x128xi32>
      %134 = arith.muli %133, %129 : vector<1x128xi32>
      %135 = arith.addi %132, %134 : vector<1x128xi32>
      %136 = arith.muli %131, %135 : vector<1x128xi32>
      %137 = arith.cmpf oge, %107, %101 : vector<1x128xf32>
      %138 = arith.extui %137 : vector<1x128xi1> to vector<1x128xi32>
      %c0_33 = arith.constant 0 : index
      %139 = arith.index_cast %5 : i32 to index
      %140 = vector.load %arg3[%c0_33, %139] : memref<16x256xf32, #tpu.memory_space<vmem>>, vector<1x128xf32>
      tpu.vector_store %arg3[%c0_33, %139], %37 {strides = array<i32>} : memref<16x256xf32, #tpu.memory_space<vmem>>, vector<1x128xf32>,
      %c1 = arith.constant 1 : index
      %141 = arith.index_cast %5 : i32 to index
      %142 = vector.load %arg3[%c1, %141] : memref<16x256xf32, #tpu.memory_space<vmem>>, vector<1x128xf32>
      tpu.vector_store %arg3[%c1, %141], %96 {strides = array<i32>} : memref<16x256xf32, #tpu.memory_space<vmem>>, vector<1x128xf32>,
      %c2 = arith.constant 2 : index
      %143 = arith.index_cast %5 : i32 to index
      %144 = vector.load %arg3[%c2, %143] : memref<16x256xf32, #tpu.memory_space<vmem>>, vector<1x128xf32>
      tpu.vector_store %arg3[%c2, %143], %97 {strides = array<i32>} : memref<16x256xf32, #tpu.memory_space<vmem>>, vector<1x128xf32>,
      %c3 = arith.constant 3 : index
      %145 = arith.index_cast %5 : i32 to index
      %146 = vector.load %arg3[%c3, %145] : memref<16x256xf32, #tpu.memory_space<vmem>>, vector<1x128xf32>
      tpu.vector_store %arg3[%c3, %145], %98 {strides = array<i32>} : memref<16x256xf32, #tpu.memory_space<vmem>>, vector<1x128xf32>,
      %c4 = arith.constant 4 : index
      %147 = arith.index_cast %5 : i32 to index
      %148 = vector.load %arg3[%c4, %147] : memref<16x256xf32, #tpu.memory_space<vmem>>, vector<1x128xf32>
      tpu.vector_store %arg3[%c4, %147], %99 {strides = array<i32>} : memref<16x256xf32, #tpu.memory_space<vmem>>, vector<1x128xf32>,
      %c5 = arith.constant 5 : index
      %149 = arith.index_cast %5 : i32 to index
      %150 = vector.load %arg3[%c5, %149] : memref<16x256xf32, #tpu.memory_space<vmem>>, vector<1x128xf32>
      tpu.vector_store %arg3[%c5, %149], %100 {strides = array<i32>} : memref<16x256xf32, #tpu.memory_space<vmem>>, vector<1x128xf32>,
      %c6 = arith.constant 6 : index
      %151 = arith.index_cast %5 : i32 to index
      %152 = vector.load %arg3[%c6, %151] : memref<16x256xf32, #tpu.memory_space<vmem>>, vector<1x128xf32>
      tpu.vector_store %arg3[%c6, %151], %101 {strides = array<i32>} : memref<16x256xf32, #tpu.memory_space<vmem>>, vector<1x128xf32>,
      %c7 = arith.constant 7 : index
      %153 = arith.index_cast %5 : i32 to index
      %154 = vector.load %arg3[%c7, %153] : memref<16x256xf32, #tpu.memory_space<vmem>>, vector<1x128xf32>
      tpu.vector_store %arg3[%c7, %153], %104 {strides = array<i32>} : memref<16x256xf32, #tpu.memory_space<vmem>>, vector<1x128xf32>,
      %c8 = arith.constant 8 : index
      %155 = arith.index_cast %5 : i32 to index
      %156 = vector.load %arg3[%c8, %155] : memref<16x256xf32, #tpu.memory_space<vmem>>, vector<1x128xf32>
      tpu.vector_store %arg3[%c8, %155], %107 {strides = array<i32>} : memref<16x256xf32, #tpu.memory_space<vmem>>, vector<1x128xf32>,
      %c9 = arith.constant 9 : index
      %157 = arith.index_cast %5 : i32 to index
      %158 = vector.load %arg3[%c9, %157] : memref<16x256xf32, #tpu.memory_space<vmem>>, vector<1x128xf32>
      tpu.vector_store %arg3[%c9, %157], %121 {strides = array<i32>} : memref<16x256xf32, #tpu.memory_space<vmem>>, vector<1x128xf32>,
      %159 = arith.sitofp %19 : vector<1x128xi32> to vector<1x128xf32>
      %c10 = arith.constant 10 : index
      %160 = arith.index_cast %5 : i32 to index
      %161 = vector.load %arg3[%c10, %160] : memref<16x256xf32, #tpu.memory_space<vmem>>, vector<1x128xf32>
      tpu.vector_store %arg3[%c10, %160], %159 {strides = array<i32>} : memref<16x256xf32, #tpu.memory_space<vmem>>, vector<1x128xf32>,
      %162 = arith.sitofp %110 : vector<1x128xi32> to vector<1x128xf32>
      %c11 = arith.constant 11 : index
      %163 = arith.index_cast %5 : i32 to index
      %164 = vector.load %arg3[%c11, %163] : memref<16x256xf32, #tpu.memory_space<vmem>>, vector<1x128xf32>
      tpu.vector_store %arg3[%c11, %163], %162 {strides = array<i32>} : memref<16x256xf32, #tpu.memory_space<vmem>>, vector<1x128xf32>,
      %165 = arith.sitofp %115 : vector<1x128xi32> to vector<1x128xf32>
      %c12 = arith.constant 12 : index
      %166 = arith.index_cast %5 : i32 to index
      %167 = vector.load %arg3[%c12, %166] : memref<16x256xf32, #tpu.memory_space<vmem>>, vector<1x128xf32>
      tpu.vector_store %arg3[%c12, %166], %165 {strides = array<i32>} : memref<16x256xf32, #tpu.memory_space<vmem>>, vector<1x128xf32>,
      %168 = arith.sitofp %136 : vector<1x128xi32> to vector<1x128xf32>
      %c13 = arith.constant 13 : index
      %169 = arith.index_cast %5 : i32 to index
      %170 = vector.load %arg3[%c13, %169] : memref<16x256xf32, #tpu.memory_space<vmem>>, vector<1x128xf32>
      tpu.vector_store %arg3[%c13, %169], %168 {strides = array<i32>} : memref<16x256xf32, #tpu.memory_space<vmem>>, vector<1x128xf32>,
      %171 = arith.sitofp %135 : vector<1x128xi32> to vector<1x128xf32>
      %c14 = arith.constant 14 : index
      %172 = arith.index_cast %5 : i32 to index
      %173 = vector.load %arg3[%c14, %172] : memref<16x256xf32, #tpu.memory_space<vmem>>, vector<1x128xf32>
      tpu.vector_store %arg3[%c14, %172], %171 {strides = array<i32>} : memref<16x256xf32, #tpu.memory_space<vmem>>, vector<1x128xf32>,
      %174 = arith.sitofp %138 : vector<1x128xi32> to vector<1x128xf32>
      %c15 = arith.constant 15 : index
      %175 = arith.index_cast %5 : i32 to index
      %176 = vector.load %arg3[%c15, %175] : memref<16x256xf32, #tpu.memory_space<vmem>>, vector<1x128xf32>
      tpu.vector_store %arg3[%c15, %175], %174 {strides = array<i32>} : memref<16x256xf32, #tpu.memory_space<vmem>>, vector<1x128xf32>,
    }
    %c2_i32_0 = arith.constant 2 : i32
    return
  }
  func.func @transform_0(%arg0: i32) -> (i32, i32) {
    %c0_i32 = arith.constant 0 : i32
    %c0_i32_0 = arith.constant 0 : i32
    return %c0_i32, %arg0 : i32, i32
  }
  func.func @transform_1(%arg0: i32) -> (i32, i32) {
    %c0_i32 = arith.constant 0 : i32
    %c0_i32_0 = arith.constant 0 : i32
    return %c0_i32, %arg0 : i32, i32
  }
  func.func @transform_2(%arg0: i32) -> (i32, i32) {
    %c0_i32 = arith.constant 0 : i32
    %c0_i32_0 = arith.constant 0 : i32
    return %c0_i32, %arg0 : i32, i32
  }
}

</mosaic_0001>

<llo_original>
// kernel: tpu_custom_call.1
$region0: #{tpu_custom_call.1}
  #allocation0 [shape = 'u32[]', space=smem, size = 0x4, offset = 0x4, fixed_abs, tag = 'smem constant byte address 0x4 - core index']
  #allocation1 [shape = 'u32[144,128]{1,0:T(1,128)}', space=vmem, size = 0x12000, scoped, tag = 'internal scratch']
  %s0 = inlined_call_operand.hbm [shape: f32[104,256], index: 0, kind: input, shape index: {}]
  %s1 = inlined_call_operand.hbm [shape: s32[2,256], index: 1, kind: input, shape index: {}]
  %s2 = inlined_call_operand.hbm [shape: f32[16,256], index: 2, kind: output, shape index: {}]
  %s3 = sld [smem:[#allocation0]]
  $region33: #{tpu_custom_call.1} parent=0
    _
  %s5 = ssub.s32 1, %s3
  %s6 = scalar_select 0, %s5, %s3
  $region1: #{tpu_custom_call.1} parent=0
    #allocation2 [shape = 'u8[106496]{0}', space=vmem, size = 0x1a000, scoped, tag = 'input window, operand 0, single buffered']
    #allocation3 [shape = 's32[1]{0}', space=sflag, size = 0x4, scoped, tag = 'scoped memory for tpu_custom_call.1']
    #allocation4 [shape = 's32[1]{0}', space=sflag, size = 0x4, scoped, tag = 'scoped memory for tpu_custom_call.1']
    #allocation5 [shape = 'u8[2048]{0}', space=vmem, size = 0x800, scoped, tag = 'input window, operand 1, single buffered']
    #allocation6 [shape = 's32[1]{0}', space=sflag, size = 0x4, scoped, tag = 'scoped memory for tpu_custom_call.1']
    #allocation7 [shape = 'u8[16384]{0}', space=vmem, size = 0x4000, scoped, tag = 'output window, operand 0, single buffered']
    %7 = vsyncpa [#allocation3], 0
    %8 = vsyncpa [#allocation6], 0
    %9 = vsyncpa [#allocation4], 0
    // Predicated region
    $region2: #{tpu_custom_call.1} parent=1 // pred_check
      _
    $region3: #{tpu_custom_call.1} parent=1 // pred_check_branch
      %11 = sbr.rel (0) target = $region5
    $region4: #{tpu_custom_call.1} parent=1 // pred_region
      %s13 = ssub.s32 3328, 3328
      %14 = vsyncadd [#allocation3], %s13
      %s15 = sshll.u32 [#allocation2], 4
      %s16 = int_to_ptr.vmem [resolvable:$true] %s15
      %21 = dma.hbm_to_vmem [thread:$0]  %s0, 3328, %s16, [#allocation3], 256, 256, 16
    $region5: #{tpu_custom_call.1} parent=1 // pred_fallthru
      _
    // Predicated region
    $region6: #{tpu_custom_call.1} parent=1 // pred_check
      _
    $region7: #{tpu_custom_call.1} parent=1 // pred_check_branch
      %23 = sbr.rel (0) target = $region9
    $region8: #{tpu_custom_call.1} parent=1 // pred_region
      %s25 = ssub.s32 64, 64
      %26 = vsyncadd [#allocation6], %s25
      %s28 = sshll.u32 [#allocation5], 4
      %s29 = int_to_ptr.vmem [resolvable:$true] %s28
      %31 = dma.hbm_to_vmem [thread:$0]  %s1, 64, %s29, [#allocation6]
    $region9: #{tpu_custom_call.1} parent=1 // pred_fallthru
      _
    // Predicated region
    $region10: #{tpu_custom_call.1} parent=1 // pred_check
      _
    $region11: #{tpu_custom_call.1} parent=1 // pred_check_branch
      %33 = sbr.rel (0) target = $region13
    $region12: #{tpu_custom_call.1} parent=1 // pred_region
      %34 = dma.done [#allocation3], 3328
    $region13: #{tpu_custom_call.1} parent=1 // pred_fallthru
      _
    // Predicated region
    $region14: #{tpu_custom_call.1} parent=1 // pred_check
      _
    $region15: #{tpu_custom_call.1} parent=1 // pred_check_branch
      %36 = sbr.rel (0) target = $region17
    $region16: #{tpu_custom_call.1} parent=1 // pred_region
      %37 = dma.done [#allocation6], 64
    $region17: #{tpu_custom_call.1} parent=1 // pred_fallthru
      _
    %v38 = vlaneseq
    %v39 = vshrl.u32 %v38, 7
    %v40 = vadd.s32 %v39, 8
    %v41 = vadd.s32 %v39, 16
    %v42 = vadd.s32 %v39, 24
    %v43 = vadd.s32 %v39, 32
    %v44 = vadd.s32 %v39, 40
    %v45 = vadd.s32 %v39, 48
    %v46 = vadd.s32 %v39, 56
    %v47 = vadd.s32 %v39, 64
    %v48 = vadd.s32 %v39, 72
    %v49 = vadd.s32 %v39, 80
    %v50 = vadd.s32 %v39, 88
    %v51 = vadd.s32 %v39, 96
    loop: start=0, step=1, limit=2
    $region18: #{tpu_custom_call.1} parent=1 // loop_pre_header
      _
    $region19: #{tpu_custom_call.1} parent=1 // loop_header
      %s53 = sphi 0, %s57
      %p54 = scmp.ge.s32.totalorder %s53, 2
    $region20: #{tpu_custom_call.1} parent=1 // loop_header_branch
      %56 = sbr.rel (%p54) target = $region24
    $region21: #{tpu_custom_call.1} parent=1 // loop_body
      %s58 = smul.u32 %s53, 128
      %s59 = sshra.s32 %s58, 7
      %s60 = sand.u32 %s58, 127
      %s61 = smul.addr %s59, 8
      %s62 = scalar_lea.vmem [#allocation2], %s61
      %v63 = vld [vmem:[%s62] sm:$0xff]
      %v64 = vld [vmem:[%s62 + $0x10] sm:$0xff]
      %v65 = vld [vmem:[%s62 + $0x20] sm:$0xff]
      %v66 = vld [vmem:[%s62 + $0x30] sm:$0xff]
      %v67 = vld [vmem:[%s62 + $0x40] sm:$0xff]
      %v68 = vld [vmem:[%s62 + $0x50] sm:$0xff]
      %v69 = vld [vmem:[%s62 + $0x60] sm:$0xff]
      %v70 = vld [vmem:[%s62 + $0x70] sm:$0xff]
      %v71 = vld [vmem:[%s62 + $0x80] sm:$0xff]
      %v72 = vld [vmem:[%s62 + $0x90] sm:$0xff]
      %v73 = vld [vmem:[%s62 + $0xa0] sm:$0xff]
      %v74 = vld [vmem:[%s62 + $0xb0] sm:$0xff]
      %v75 = vld [vmem:[%s62 + $0xc0] sm:$0xff]
      %s76 = smul.addr %s59, 2
      %s77 = scalar_lea.vmem [#allocation5], %s76
      %v78 = vld [vmem:[%s77] sm:$0x3]
      %v79 = vmax.f32 %v63, %v67
      %v80 = vmax.f32 %v64, %v68
      %v81 = vmax.f32 %v65, %v69
      %v82 = vmax.f32 %v66, %v70
      %v83 = vmax.f32 %v79, %v71
      %v84 = vmax.f32 %v80, %v72
      %v85 = vmax.f32 %v81, %v73
      %v86 = vmax.f32 %v82, %v74
      %v87 = vmax.f32 %v83, %v75
      %v88 = vmax.f32 %v87, %v84
      %v89 = vmax.f32 %v85, %v86
      %v90 = vmax.f32 %v88, %v89
      %v91 = vrot.slane %v90, 4
      %v92 = vmax.f32 %v90, %v91
      %v93 = vrot.slane %v92, 2
      %v94 = vmax.f32 %v92, %v93
      %v95 = vrot.slane %v94, 1
      %v96 = vmax.f32 %v94, %v95
      %vm97 = vcmp.eq.f32.partialorder %v63, %v96
      %vm98 = vcmp.eq.f32.partialorder %v64, %v96
      %vm99 = vcmp.eq.f32.partialorder %v65, %v96
      %vm100 = vcmp.eq.f32.partialorder %v66, %v96
      %vm101 = vcmp.eq.f32.partialorder %v67, %v96
      %vm102 = vcmp.eq.f32.partialorder %v68, %v96
      %vm103 = vcmp.eq.f32.partialorder %v69, %v96
      %vm104 = vcmp.eq.f32.partialorder %v70, %v96
      %vm105 = vcmp.eq.f32.partialorder %v71, %v96
      %vm106 = vcmp.eq.f32.partialorder %v72, %v96
      %vm107 = vcmp.eq.f32.partialorder %v73, %v96
      %vm108 = vcmp.eq.f32.partialorder %v74, %v96
      %vm109 = vcmp.eq.f32.partialorder %v75, %v96
      %v110 = vsel %vm97, %v39, 104
      %v111 = vsel %vm98, %v40, 104
      %v112 = vsel %vm99, %v41, 104
      %v113 = vsel %vm100, %v42, 104
      %v114 = vsel %vm101, %v43, 104
      %v115 = vsel %vm102, %v44, 104
      %v116 = vsel %vm103, %v45, 104
      %v117 = vsel %vm104, %v46, 104
      %v118 = vsel %vm105, %v47, 104
      %v119 = vsel %vm106, %v48, 104
      %v120 = vsel %vm107, %v49, 104
      %v121 = vsel %vm108, %v50, 104
      %v122 = vsel %vm109, %v51, 104
      %vm123 = vcmp.lt.s32.totalorder %v110, %v114
      %v124 = vsel %vm123, %v110, %v114
      %vm125 = vcmp.lt.s32.totalorder %v111, %v115
      %v126 = vsel %vm125, %v111, %v115
      %vm127 = vcmp.lt.s32.totalorder %v112, %v116
      %v128 = vsel %vm127, %v112, %v116
      %vm129 = vcmp.lt.s32.totalorder %v113, %v117
      %v130 = vsel %vm129, %v113, %v117
      %vm131 = vcmp.lt.s32.totalorder %v124, %v118
      %v132 = vsel %vm131, %v124, %v118
      %vm133 = vcmp.lt.s32.totalorder %v126, %v119
      %v134 = vsel %vm133, %v126, %v119
      %vm135 = vcmp.lt.s32.totalorder %v128, %v120
      %v136 = vsel %vm135, %v128, %v120
      %vm137 = vcmp.lt.s32.totalorder %v130, %v121
      %v138 = vsel %vm137, %v130, %v121
      %vm139 = vcmp.lt.s32.totalorder %v132, %v122
      %v140 = vsel %vm139, %v132, %v122
      %vm141 = vcmp.lt.s32.totalorder %v140, %v134
      %v142 = vsel %vm141, %v140, %v134
      %vm143 = vcmp.lt.s32.totalorder %v136, %v138
      %v144 = vsel %vm143, %v136, %v138
      %vm145 = vcmp.lt.s32.totalorder %v142, %v144
      %v146 = vsel %vm145, %v142, %v144
      %v147 = vrot.slane %v146, 4
      %vm148 = vcmp.lt.s32.totalorder %v146, %v147
      %v149 = vsel %vm148, %v146, %v147
      %v150 = vrot.slane %v149, 2
      %vm151 = vcmp.lt.s32.totalorder %v149, %v150
      %v152 = vsel %vm151, %v149, %v150
      %v153 = vrot.slane %v152, 1
      %vm154 = vcmp.lt.s32.totalorder %v152, %v153
      %v155 = vsel %vm154, %v152, %v153
      %v156 = vlaneseq
      %v157 = vshrl.u32 %v156, 7
      %v158 = vsub.s32 0, %v157
      %v159 = vrot.slane %v78, %v158
      %vm160 = vcmp.eq.s32.totalorder %v39, %v159
      %vm161 = vcmp.eq.s32.totalorder %v40, %v159
      %vm162 = vcmp.eq.s32.totalorder %v41, %v159
      %vm163 = vcmp.eq.s32.totalorder %v42, %v159
      %vm164 = vcmp.eq.s32.totalorder %v43, %v159
      %vm165 = vcmp.eq.s32.totalorder %v44, %v159
      %vm166 = vcmp.eq.s32.totalorder %v45, %v159
      %vm167 = vcmp.eq.s32.totalorder %v46, %v159
      %vm168 = vcmp.eq.s32.totalorder %v47, %v159
      %vm169 = vcmp.eq.s32.totalorder %v48, %v159
      %vm170 = vcmp.eq.s32.totalorder %v49, %v159
      %vm171 = vcmp.eq.s32.totalorder %v50, %v159
      %vm172 = vcmp.eq.s32.totalorder %v51, %v159
      %v173 = vsel %vm160, %v63, 0.0
      %v174 = vsel %vm161, %v64, 0.0
      %v175 = vsel %vm162, %v65, 0.0
      %v176 = vsel %vm163, %v66, 0.0
      %v177 = vsel %vm164, %v67, 0.0
      %v178 = vsel %vm165, %v68, 0.0
      %v179 = vsel %vm166, %v69, 0.0
      %v180 = vsel %vm167, %v70, 0.0
      %v181 = vsel %vm168, %v71, 0.0
      %v182 = vsel %vm169, %v72, 0.0
      %v183 = vsel %vm170, %v73, 0.0
      %v184 = vsel %vm171, %v74, 0.0
      %v185 = vsel %vm172, %v75, 0.0
      %v186 = vadd.f32 %v173, %v174
      %v187 = vadd.f32 %v186, %v175
      %v188 = vadd.f32 %v187, %v176
      %v189 = vadd.f32 %v188, %v177
      %v190 = vadd.f32 %v189, %v178
      %v191 = vadd.f32 %v190, %v179
      %v192 = vadd.f32 %v191, %v180
      %v193 = vadd.f32 %v192, %v181
      %v194 = vadd.f32 %v193, %v182
      %v195 = vadd.f32 %v194, %v183
      %v196 = vadd.f32 %v195, %v184
      %v197 = vadd.f32 %v196, %v185
      %v198 = vrot.slane %v197, 4
      %v199 = vadd.f32 %v197, %v198
      %v200 = vrot.slane %v199, 2
      %v201 = vadd.f32 %v199, %v200
      %v202 = vrot.slane %v201, 1
      %v203 = vadd.f32 %v201, %v202
      %v204 = vlaneseq
      %v205 = vshrl.u32 %v204, 7
      %v206 = vsub.s32 1, %v205
      %v207 = vrot.slane %v78, %v206
      %vm208 = vcmp.eq.s32.totalorder %v39, %v207
      %vm209 = vcmp.eq.s32.totalorder %v40, %v207
      %vm210 = vcmp.eq.s32.totalorder %v41, %v207
      %vm211 = vcmp.eq.s32.totalorder %v42, %v207
      %vm212 = vcmp.eq.s32.totalorder %v43, %v207
      %vm213 = vcmp.eq.s32.totalorder %v44, %v207
      %vm214 = vcmp.eq.s32.totalorder %v45, %v207
      %vm215 = vcmp.eq.s32.totalorder %v46, %v207
      %vm216 = vcmp.eq.s32.totalorder %v47, %v207
      %vm217 = vcmp.eq.s32.totalorder %v48, %v207
      %vm218 = vcmp.eq.s32.totalorder %v49, %v207
      %vm219 = vcmp.eq.s32.totalorder %v50, %v207
      %vm220 = vcmp.eq.s32.totalorder %v51, %v207
      %v221 = vsel %vm208, %v63, 0.0
      %v222 = vsel %vm209, %v64, 0.0
      %v223 = vsel %vm210, %v65, 0.0
      %v224 = vsel %vm211, %v66, 0.0
      %v225 = vsel %vm212, %v67, 0.0
      %v226 = vsel %vm213, %v68, 0.0
      %v227 = vsel %vm214, %v69, 0.0
      %v228 = vsel %vm215, %v70, 0.0
      %v229 = vsel %vm216, %v71, 0.0
      %v230 = vsel %vm217, %v72, 0.0
      %v231 = vsel %vm218, %v73, 0.0
      %v232 = vsel %vm219, %v74, 0.0
      %v233 = vsel %vm220, %v75, 0.0
      %v234 = vadd.f32 %v221, %v222
      %v235 = vadd.f32 %v234, %v223
      %v236 = vadd.f32 %v235, %v224
      %v237 = vadd.f32 %v236, %v225
      %v238 = vadd.f32 %v237, %v226
      %v239 = vadd.f32 %v238, %v227
      %v240 = vadd.f32 %v239, %v228
      %v241 = vadd.f32 %v240, %v229
      %v242 = vadd.f32 %v241, %v230
      %v243 = vadd.f32 %v242, %v231
      %v244 = vadd.f32 %v243, %v232
      %v245 = vadd.f32 %v244, %v233
      %v246 = vrot.slane %v245, 4
      %v247 = vadd.f32 %v245, %v246
      %v248 = vrot.slane %v247, 2
      %v249 = vadd.f32 %v247, %v248
      %v250 = vrot.slane %v249, 1
      %v251 = vadd.f32 %v249, %v250
      %v252 = vsub.f32 %v63, %v96
      %v253 = vsub.f32 %v64, %v96
      %v254 = vsub.f32 %v65, %v96
      %v255 = vsub.f32 %v66, %v96
      %v256 = vsub.f32 %v67, %v96
      %v257 = vsub.f32 %v68, %v96
      %v258 = vsub.f32 %v69, %v96
      %v259 = vsub.f32 %v70, %v96
      %v260 = vsub.f32 %v71, %v96
      %v261 = vsub.f32 %v72, %v96
      %v262 = vsub.f32 %v73, %v96
      %v263 = vsub.f32 %v74, %v96
      %v264 = vsub.f32 %v75, %v96
      %v265 = vmul.f32 %v252, 1.442695
      %v266 = vpow.pop %v265
      %v267 = vmul.f32 %v253, 1.442695
      %v268 = vpow.pop %v267
      %v269 = vmul.f32 %v254, 1.442695
      %v270 = vpow.pop %v269
      %v271 = vmul.f32 %v255, 1.442695
      %v272 = vpow.pop %v271
      %v273 = vmul.f32 %v256, 1.442695
      %v274 = vpow.pop %v273
      %v275 = vmul.f32 %v257, 1.442695
      %v276 = vpow.pop %v275
      %v277 = vmul.f32 %v258, 1.442695
      %v278 = vpow.pop %v277
      %v279 = vmul.f32 %v259, 1.442695
      %v280 = vpow.pop %v279
      %v281 = vmul.f32 %v260, 1.442695
      %v282 = vpow.pop %v281
      %v283 = vmul.f32 %v261, 1.442695
      %v284 = vpow.pop %v283
      %v285 = vmul.f32 %v262, 1.442695
      %v286 = vpow.pop %v285
      %v287 = vmul.f32 %v263, 1.442695
      %v288 = vpow.pop %v287
      %v289 = vmul.f32 %v264, 1.442695
      %v290 = vpow.pop %v289
      %v291 = vadd.f32 %v266, %v268
      %v292 = vadd.f32 %v291, %v270
      %v293 = vadd.f32 %v292, %v272
      %v294 = vadd.f32 %v293, %v274
      %v295 = vadd.f32 %v294, %v276
      %v296 = vadd.f32 %v295, %v278
      %v297 = vadd.f32 %v296, %v280
      %v298 = vadd.f32 %v297, %v282
      %v299 = vadd.f32 %v298, %v284
      %v300 = vadd.f32 %v299, %v286
      %v301 = vadd.f32 %v300, %v288
      %v302 = vadd.f32 %v301, %v290
      %v303 = vrot.slane %v302, 4
      %v304 = vadd.f32 %v302, %v303
      %v305 = vrot.slane %v304, 2
      %v306 = vadd.f32 %v304, %v305
      %v307 = vrot.slane %v306, 1
      %v308 = vadd.f32 %v306, %v307
      %v309 = vrcp.pop %v308
      %v310 = vsel %vm97, -1.0, %v266
      %v311 = vsel %vm98, -1.0, %v268
      %v312 = vsel %vm99, -1.0, %v270
      %v313 = vsel %vm100, -1.0, %v272
      %v314 = vsel %vm101, -1.0, %v274
      %v315 = vsel %vm102, -1.0, %v276
      %v316 = vsel %vm103, -1.0, %v278
      %v317 = vsel %vm104, -1.0, %v280
      %v318 = vsel %vm105, -1.0, %v282
      %v319 = vsel %vm106, -1.0, %v284
      %v320 = vsel %vm107, -1.0, %v286
      %v321 = vsel %vm108, -1.0, %v288
      %v322 = vsel %vm109, -1.0, %v290
      %v323 = vmax.f32 %v310, %v314
      %v324 = vmax.f32 %v311, %v315
      %v325 = vmax.f32 %v312, %v316
      %v326 = vmax.f32 %v313, %v317
      %v327 = vmax.f32 %v323, %v318
      %v328 = vmax.f32 %v324, %v319
      %v329 = vmax.f32 %v325, %v320
      %v330 = vmax.f32 %v326, %v321
      %v331 = vmax.f32 %v327, %v322
      %v332 = vmax.f32 %v331, %v328
      %v333 = vmax.f32 %v329, %v330
      %v334 = vmax.f32 %v332, %v333
      %v335 = vrot.slane %v334, 4
      %v336 = vmax.f32 %v334, %v335
      %v337 = vrot.slane %v336, 2
      %v338 = vmax.f32 %v336, %v337
      %v339 = vrot.slane %v338, 1
      %v340 = vmax.f32 %v338, %v339
      %vm341 = vcmp.eq.f32.partialorder %v310, %v340
      %vm342 = vcmp.eq.f32.partialorder %v311, %v340
      %vm343 = vcmp.eq.f32.partialorder %v312, %v340
      %vm344 = vcmp.eq.f32.partialorder %v313, %v340
      %vm345 = vcmp.eq.f32.partialorder %v314, %v340
      %vm346 = vcmp.eq.f32.partialorder %v315, %v340
      %vm347 = vcmp.eq.f32.partialorder %v316, %v340
      %vm348 = vcmp.eq.f32.partialorder %v317, %v340
      %vm349 = vcmp.eq.f32.partialorder %v318, %v340
      %vm350 = vcmp.eq.f32.partialorder %v319, %v340
      %vm351 = vcmp.eq.f32.partialorder %v320, %v340
      %vm352 = vcmp.eq.f32.partialorder %v321, %v340
      %vm353 = vcmp.eq.f32.partialorder %v322, %v340
      %v354 = vsel %vm341, -1.0, %v310
      %v355 = vsel %vm342, -1.0, %v311
      %v356 = vsel %vm343, -1.0, %v312
      %v357 = vsel %vm344, -1.0, %v313
      %v358 = vsel %vm345, -1.0, %v314
      %v359 = vsel %vm346, -1.0, %v315
      %v360 = vsel %vm347, -1.0, %v316
      %v361 = vsel %vm348, -1.0, %v317
      %v362 = vsel %vm349, -1.0, %v318
      %v363 = vsel %vm350, -1.0, %v319
      %v364 = vsel %vm351, -1.0, %v320
      %v365 = vsel %vm352, -1.0, %v321
      %v366 = vsel %vm353, -1.0, %v322
      %v367 = vmax.f32 %v354, %v358
      %v368 = vmax.f32 %v355, %v359
      %v369 = vmax.f32 %v356, %v360
      %v370 = vmax.f32 %v357, %v361
      %v371 = vmax.f32 %v367, %v362
      %v372 = vmax.f32 %v368, %v363
      %v373 = vmax.f32 %v369, %v364
      %v374 = vmax.f32 %v370, %v365
      %v375 = vmax.f32 %v371, %v366
      %v376 = vmax.f32 %v375, %v372
      %v377 = vmax.f32 %v373, %v374
      %v378 = vmax.f32 %v376, %v377
      %v379 = vrot.slane %v378, 4
      %v380 = vmax.f32 %v378, %v379
      %v381 = vrot.slane %v380, 2
      %v382 = vmax.f32 %v380, %v381
      %v383 = vrot.slane %v382, 1
      %v384 = vmax.f32 %v382, %v383
      %vm385 = vcmp.eq.f32.partialorder %v354, %v384
      %vm386 = vcmp.eq.f32.partialorder %v355, %v384
      %vm387 = vcmp.eq.f32.partialorder %v356, %v384
      %vm388 = vcmp.eq.f32.partialorder %v357, %v384
      %vm389 = vcmp.eq.f32.partialorder %v358, %v384
      %vm390 = vcmp.eq.f32.partialorder %v359, %v384
      %vm391 = vcmp.eq.f32.partialorder %v360, %v384
      %vm392 = vcmp.eq.f32.partialorder %v361, %v384
      %vm393 = vcmp.eq.f32.partialorder %v362, %v384
      %vm394 = vcmp.eq.f32.partialorder %v363, %v384
      %vm395 = vcmp.eq.f32.partialorder %v364, %v384
      %vm396 = vcmp.eq.f32.partialorder %v365, %v384
      %vm397 = vcmp.eq.f32.partialorder %v366, %v384
      %v398 = vsel %vm385, -1.0, %v354
      %v399 = vsel %vm386, -1.0, %v355
      %v400 = vsel %vm387, -1.0, %v356
      %v401 = vsel %vm388, -1.0, %v357
      %v402 = vsel %vm389, -1.0, %v358
      %v403 = vsel %vm390, -1.0, %v359
      %v404 = vsel %vm391, -1.0, %v360
      %v405 = vsel %vm392, -1.0, %v361
      %v406 = vsel %vm393, -1.0, %v362
      %v407 = vsel %vm394, -1.0, %v363
      %v408 = vsel %vm395, -1.0, %v364
      %v409 = vsel %vm396, -1.0, %v365
      %v410 = vsel %vm397, -1.0, %v366
      %v411 = vmax.f32 %v398, %v402
      %v412 = vmax.f32 %v399, %v403
      %v413 = vmax.f32 %v400, %v404
      %v414 = vmax.f32 %v401, %v405
      %v415 = vmax.f32 %v411, %v406
      %v416 = vmax.f32 %v412, %v407
      %v417 = vmax.f32 %v413, %v408
      %v418 = vmax.f32 %v414, %v409
      %v419 = vmax.f32 %v415, %v410
      %v420 = vmax.f32 %v419, %v416
      %v421 = vmax.f32 %v417, %v418
      %v422 = vmax.f32 %v420, %v421
      %v423 = vrot.slane %v422, 4
      %v424 = vmax.f32 %v422, %v423
      %v425 = vrot.slane %v424, 2
      %v426 = vmax.f32 %v424, %v425
      %v427 = vrot.slane %v426, 1
      %v428 = vmax.f32 %v426, %v427
      %vm429 = vcmp.eq.f32.partialorder %v398, %v428
      %vm430 = vcmp.eq.f32.partialorder %v399, %v428
      %vm431 = vcmp.eq.f32.partialorder %v400, %v428
      %vm432 = vcmp.eq.f32.partialorder %v401, %v428
      %vm433 = vcmp.eq.f32.partialorder %v402, %v428
      %vm434 = vcmp.eq.f32.partialorder %v403, %v428
      %vm435 = vcmp.eq.f32.partialorder %v404, %v428
      %vm436 = vcmp.eq.f32.partialorder %v405, %v428
      %vm437 = vcmp.eq.f32.partialorder %v406, %v428
      %vm438 = vcmp.eq.f32.partialorder %v407, %v428
      %vm439 = vcmp.eq.f32.partialorder %v408, %v428
      %vm440 = vcmp.eq.f32.partialorder %v409, %v428
      %vm441 = vcmp.eq.f32.partialorder %v410, %v428
      %v442 = vsel %vm429, -1.0, %v398
      %v443 = vsel %vm430, -1.0, %v399
      %v444 = vsel %vm431, -1.0, %v400
      %v445 = vsel %vm432, -1.0, %v401
      %v446 = vsel %vm433, -1.0, %v402
      %v447 = vsel %vm434, -1.0, %v403
      %v448 = vsel %vm435, -1.0, %v404
      %v449 = vsel %vm436, -1.0, %v405
      %v450 = vsel %vm437, -1.0, %v406
      %v451 = vsel %vm438, -1.0, %v407
      %v452 = vsel %vm439, -1.0, %v408
      %v453 = vsel %vm440, -1.0, %v409
      %v454 = vsel %vm441, -1.0, %v410
      %v455 = vmax.f32 %v442, %v446
      %v456 = vmax.f32 %v443, %v447
      %v457 = vmax.f32 %v444, %v448
      %v458 = vmax.f32 %v445, %v449
      %v459 = vmax.f32 %v455, %v450
      %v460 = vmax.f32 %v456, %v451
      %v461 = vmax.f32 %v457, %v452
      %v462 = vmax.f32 %v458, %v453
      %v463 = vmax.f32 %v459, %v454
      %v464 = vmax.f32 %v463, %v460
      %v465 = vmax.f32 %v461, %v462
      %v466 = vmax.f32 %v464, %v465
      %v467 = vrot.slane %v466, 4
      %v468 = vmax.f32 %v466, %v467
      %v469 = vrot.slane %v468, 2
      %v470 = vmax.f32 %v468, %v469
      %v471 = vrot.slane %v470, 1
      %v472 = vmax.f32 %v470, %v471
      %vm473 = vcmp.eq.f32.partialorder %v442, %v472
      %vm474 = vcmp.eq.f32.partialorder %v443, %v472
      %vm475 = vcmp.eq.f32.partialorder %v444, %v472
      %vm476 = vcmp.eq.f32.partialorder %v445, %v472
      %vm477 = vcmp.eq.f32.partialorder %v446, %v472
      %vm478 = vcmp.eq.f32.partialorder %v447, %v472
      %vm479 = vcmp.eq.f32.partialorder %v448, %v472
      %vm480 = vcmp.eq.f32.partialorder %v449, %v472
      %vm481 = vcmp.eq.f32.partialorder %v450, %v472
      %vm482 = vcmp.eq.f32.partialorder %v451, %v472
      %vm483 = vcmp.eq.f32.partialorder %v452, %v472
      %vm484 = vcmp.eq.f32.partialorder %v453, %v472
      %vm485 = vcmp.eq.f32.partialorder %v454, %v472
      %v486 = vsel %vm473, -1.0, %v442
      %v487 = vsel %vm474, -1.0, %v443
      %v488 = vsel %vm475, -1.0, %v444
      %v489 = vsel %vm476, -1.0, %v445
      %v490 = vsel %vm477, -1.0, %v446
      %v491 = vsel %vm478, -1.0, %v447
      %v492 = vsel %vm479, -1.0, %v448
      %v493 = vsel %vm480, -1.0, %v449
      %v494 = vsel %vm481, -1.0, %v450
      %v495 = vsel %vm482, -1.0, %v451
      %v496 = vsel %vm483, -1.0, %v452
      %v497 = vsel %vm484, -1.0, %v453
      %v498 = vsel %vm485, -1.0, %v454
      %v499 = vmax.f32 %v486, %v490
      %v500 = vmax.f32 %v487, %v491
      %v501 = vmax.f32 %v488, %v492
      %v502 = vmax.f32 %v489, %v493
      %v503 = vmax.f32 %v499, %v494
      %v504 = vmax.f32 %v500, %v495
      %v505 = vmax.f32 %v501, %v496
      %v506 = vmax.f32 %v502, %v497
      %v507 = vmax.f32 %v503, %v498
      %v508 = vmax.f32 %v507, %v504
      %v509 = vmax.f32 %v505, %v506
      %v510 = vmax.f32 %v508, %v509
      %v511 = vrot.slane %v510, 4
      %v512 = vmax.f32 %v510, %v511
      %v513 = vrot.slane %v512, 2
      %v514 = vmax.f32 %v512, %v513
      %v515 = vrot.slane %v514, 1
      %v516 = vmax.f32 %v514, %v515
      %vm517 = vcmp.eq.f32.partialorder %v486, %v516
      %vm518 = vcmp.eq.f32.partialorder %v487, %v516
      %vm519 = vcmp.eq.f32.partialorder %v488, %v516
      %vm520 = vcmp.eq.f32.partialorder %v489, %v516
      %vm521 = vcmp.eq.f32.partialorder %v490, %v516
      %vm522 = vcmp.eq.f32.partialorder %v491, %v516
      %vm523 = vcmp.eq.f32.partialorder %v492, %v516
      %vm524 = vcmp.eq.f32.partialorder %v493, %v516
      %vm525 = vcmp.eq.f32.partialorder %v494, %v516
      %vm526 = vcmp.eq.f32.partialorder %v495, %v516
      %vm527 = vcmp.eq.f32.partialorder %v496, %v516
      %vm528 = vcmp.eq.f32.partialorder %v497, %v516
      %vm529 = vcmp.eq.f32.partialorder %v498, %v516
      %v530 = vsel %vm517, -1.0, %v486
      %v531 = vsel %vm518, -1.0, %v487
      %v532 = vsel %vm519, -1.0, %v488
      %v533 = vsel %vm520, -1.0, %v489
      %v534 = vsel %vm521, -1.0, %v490
      %v535 = vsel %vm522, -1.0, %v491
      %v536 = vsel %vm523, -1.0, %v492
      %v537 = vsel %vm524, -1.0, %v493
      %v538 = vsel %vm525, -1.0, %v494
      %v539 = vsel %vm526, -1.0, %v495
      %v540 = vsel %vm527, -1.0, %v496
      %v541 = vsel %vm528, -1.0, %v497
      %v542 = vsel %vm529, -1.0, %v498
      %v543 = vmax.f32 %v530, %v534
      %v544 = vmax.f32 %v531, %v535
      %v545 = vmax.f32 %v532, %v536
      %v546 = vmax.f32 %v533, %v537
      %v547 = vmax.f32 %v543, %v538
      %v548 = vmax.f32 %v544, %v539
      %v549 = vmax.f32 %v545, %v540
      %v550 = vmax.f32 %v546, %v541
      %v551 = vmax.f32 %v547, %v542
      %v552 = vmax.f32 %v551, %v548
      %v553 = vmax.f32 %v549, %v550
      %v554 = vmax.f32 %v552, %v553
      %v555 = vrot.slane %v554, 4
      %v556 = vmax.f32 %v554, %v555
      %v557 = vrot.slane %v556, 2
      %v558 = vmax.f32 %v556, %v557
      %v559 = vrot.slane %v558, 1
      %v560 = vmax.f32 %v558, %v559
      %vm561 = vcmp.eq.f32.partialorder %v530, %v560
      %vm562 = vcmp.eq.f32.partialorder %v531, %v560
      %vm563 = vcmp.eq.f32.partialorder %v532, %v560
      %vm564 = vcmp.eq.f32.partialorder %v533, %v560
      %vm565 = vcmp.eq.f32.partialorder %v534, %v560
      %vm566 = vcmp.eq.f32.partialorder %v535, %v560
      %vm567 = vcmp.eq.f32.partialorder %v536, %v560
      %vm568 = vcmp.eq.f32.partialorder %v537, %v560
      %vm569 = vcmp.eq.f32.partialorder %v538, %v560
      %vm570 = vcmp.eq.f32.partialorder %v539, %v560
      %vm571 = vcmp.eq.f32.partialorder %v540, %v560
      %vm572 = vcmp.eq.f32.partialorder %v541, %v560
      %vm573 = vcmp.eq.f32.partialorder %v542, %v560
      %v574 = vsel %vm561, -1.0, %v530
      %v575 = vsel %vm562, -1.0, %v531
      %v576 = vsel %vm563, -1.0, %v532
      %v577 = vsel %vm564, -1.0, %v533
      %v578 = vsel %vm565, -1.0, %v534
      %v579 = vsel %vm566, -1.0, %v535
      %v580 = vsel %vm567, -1.0, %v536
      %v581 = vsel %vm568, -1.0, %v537
      %v582 = vsel %vm569, -1.0, %v538
      %v583 = vsel %vm570, -1.0, %v539
      %v584 = vsel %vm571, -1.0, %v540
      %v585 = vsel %vm572, -1.0, %v541
      %v586 = vsel %vm573, -1.0, %v542
      %v587 = vmax.f32 %v574, %v578
      %v588 = vmax.f32 %v575, %v579
      %v589 = vmax.f32 %v576, %v580
      %v590 = vmax.f32 %v577, %v581
      %v591 = vmax.f32 %v587, %v582
      %v592 = vmax.f32 %v588, %v583
      %v593 = vmax.f32 %v589, %v584
      %v594 = vmax.f32 %v590, %v585
      %v595 = vmax.f32 %v591, %v586
      %v596 = vmax.f32 %v595, %v592
      %v597 = vmax.f32 %v593, %v594
      %v598 = vmax.f32 %v596, %v597
      %v599 = vrot.slane %v598, 4
      %v600 = vmax.f32 %v598, %v599
      %v601 = vrot.slane %v600, 2
      %v602 = vmax.f32 %v600, %v601
      %v603 = vrot.slane %v602, 1
      %v604 = vmax.f32 %v602, %v603
      %vm605 = vcmp.eq.f32.partialorder %v574, %v604
      %vm606 = vcmp.eq.f32.partialorder %v575, %v604
      %vm607 = vcmp.eq.f32.partialorder %v576, %v604
      %vm608 = vcmp.eq.f32.partialorder %v577, %v604
      %vm609 = vcmp.eq.f32.partialorder %v578, %v604
      %vm610 = vcmp.eq.f32.partialorder %v579, %v604
      %vm611 = vcmp.eq.f32.partialorder %v580, %v604
      %vm612 = vcmp.eq.f32.partialorder %v581, %v604
      %vm613 = vcmp.eq.f32.partialorder %v582, %v604
      %vm614 = vcmp.eq.f32.partialorder %v583, %v604
      %vm615 = vcmp.eq.f32.partialorder %v584, %v604
      %vm616 = vcmp.eq.f32.partialorder %v585, %v604
      %vm617 = vcmp.eq.f32.partialorder %v586, %v604
      %v618 = vsel %vm605, -1.0, %v574
      %v619 = vsel %vm606, -1.0, %v575
      %v620 = vsel %vm607, -1.0, %v576
      %v621 = vsel %vm608, -1.0, %v577
      %v622 = vsel %vm609, -1.0, %v578
      %v623 = vsel %vm610, -1.0, %v579
      %v624 = vsel %vm611, -1.0, %v580
      %v625 = vsel %vm612, -1.0, %v581
      %v626 = vsel %vm613, -1.0, %v582
      %v627 = vsel %vm614, -1.0, %v583
      %v628 = vsel %vm615, -1.0, %v584
      %v629 = vsel %vm616, -1.0, %v585
      %v630 = vsel %vm617, -1.0, %v586
      %v631 = vmax.f32 %v618, %v622
      %v632 = vmax.f32 %v619, %v623
      %v633 = vmax.f32 %v620, %v624
      %v634 = vmax.f32 %v621, %v625
      %v635 = vmax.f32 %v631, %v626
      %v636 = vmax.f32 %v632, %v627
      %v637 = vmax.f32 %v633, %v628
      %v638 = vmax.f32 %v634, %v629
      %v639 = vmax.f32 %v635, %v630
      %v640 = vmax.f32 %v639, %v636
      %v641 = vmax.f32 %v637, %v638
      %v642 = vmax.f32 %v640, %v641
      %v643 = vrot.slane %v642, 4
      %v644 = vmax.f32 %v642, %v643
      %v645 = vrot.slane %v644, 2
      %v646 = vmax.f32 %v644, %v645
      %v647 = vrot.slane %v646, 1
      %v648 = vmax.f32 %v646, %v647
      %vm649 = vcmp.eq.f32.partialorder %v618, %v648
      %vm650 = vcmp.eq.f32.partialorder %v619, %v648
      %vm651 = vcmp.eq.f32.partialorder %v620, %v648
      %vm652 = vcmp.eq.f32.partialorder %v621, %v648
      %vm653 = vcmp.eq.f32.partialorder %v622, %v648
      %vm654 = vcmp.eq.f32.partialorder %v623, %v648
      %vm655 = vcmp.eq.f32.partialorder %v624, %v648
      %vm656 = vcmp.eq.f32.partialorder %v625, %v648
      %vm657 = vcmp.eq.f32.partialorder %v626, %v648
      %vm658 = vcmp.eq.f32.partialorder %v627, %v648
      %vm659 = vcmp.eq.f32.partialorder %v628, %v648
      %vm660 = vcmp.eq.f32.partialorder %v629, %v648
      %vm661 = vcmp.eq.f32.partialorder %v630, %v648
      %v662 = vsel %vm649, -1.0, %v618
      %v663 = vsel %vm650, -1.0, %v619
      %v664 = vsel %vm651, -1.0, %v620
      %v665 = vsel %vm652, -1.0, %v621
      %v666 = vsel %vm653, -1.0, %v622
      %v667 = vsel %vm654, -1.0, %v623
      %v668 = vsel %vm655, -1.0, %v624
      %v669 = vsel %vm656, -1.0, %v625
      %v670 = vsel %vm657, -1.0, %v626
      %v671 = vsel %vm658, -1.0, %v627
      %v672 = vsel %vm659, -1.0, %v628
      %v673 = vsel %vm660, -1.0, %v629
      %v674 = vsel %vm661, -1.0, %v630
      %v675 = vmax.f32 %v662, %v666
      %v676 = vmax.f32 %v663, %v667
      %v677 = vmax.f32 %v664, %v668
      %v678 = vmax.f32 %v665, %v669
      %v679 = vmax.f32 %v675, %v670
      %v680 = vmax.f32 %v676, %v671
      %v681 = vmax.f32 %v677, %v672
      %v682 = vmax.f32 %v678, %v673
      %v683 = vmax.f32 %v679, %v674
      %v684 = vmax.f32 %v683, %v680
      %v685 = vmax.f32 %v681, %v682
      %v686 = vmax.f32 %v684, %v685
      %v687 = vrot.slane %v686, 4
      %v688 = vmax.f32 %v686, %v687
      %v689 = vrot.slane %v688, 2
      %v690 = vmax.f32 %v688, %v689
      %v691 = vrot.slane %v690, 1
      %v692 = vmax.f32 %v690, %v691
      %vm693 = vcmp.eq.f32.partialorder %v662, %v692
      %vm694 = vcmp.eq.f32.partialorder %v663, %v692
      %vm695 = vcmp.eq.f32.partialorder %v664, %v692
      %vm696 = vcmp.eq.f32.partialorder %v665, %v692
      %vm697 = vcmp.eq.f32.partialorder %v666, %v692
      %vm698 = vcmp.eq.f32.partialorder %v667, %v692
      %vm699 = vcmp.eq.f32.partialorder %v668, %v692
      %vm700 = vcmp.eq.f32.partialorder %v669, %v692
      %vm701 = vcmp.eq.f32.partialorder %v670, %v692
      %vm702 = vcmp.eq.f32.partialorder %v671, %v692
      %vm703 = vcmp.eq.f32.partialorder %v672, %v692
      %vm704 = vcmp.eq.f32.partialorder %v673, %v692
      %vm705 = vcmp.eq.f32.partialorder %v674, %v692
      %v706 = vsel %vm693, -1.0, %v662
      %v707 = vsel %vm694, -1.0, %v663
      %v708 = vsel %vm695, -1.0, %v664
      %v709 = vsel %vm696, -1.0, %v665
      %v710 = vsel %vm697, -1.0, %v666
      %v711 = vsel %vm698, -1.0, %v667
      %v712 = vsel %vm699, -1.0, %v668
      %v713 = vsel %vm700, -1.0, %v669
      %v714 = vsel %vm701, -1.0, %v670
      %v715 = vsel %vm702, -1.0, %v671
      %v716 = vsel %vm703, -1.0, %v672
      %v717 = vsel %vm704, -1.0, %v673
      %v718 = vsel %vm705, -1.0, %v674
      %v719 = vmax.f32 %v706, %v710
      %v720 = vmax.f32 %v707, %v711
      %v721 = vmax.f32 %v708, %v712
      %v722 = vmax.f32 %v709, %v713
      %v723 = vmax.f32 %v719, %v714
      %v724 = vmax.f32 %v720, %v715
      %v725 = vmax.f32 %v721, %v716
      %v726 = vmax.f32 %v722, %v717
      %v727 = vmax.f32 %v723, %v718
      %v728 = vmax.f32 %v727, %v724
      %v729 = vmax.f32 %v725, %v726
      %v730 = vmax.f32 %v728, %v729
      %v731 = vrot.slane %v730, 4
      %v732 = vmax.f32 %v730, %v731
      %v733 = vrot.slane %v732, 2
      %v734 = vmax.f32 %v732, %v733
      %v735 = vrot.slane %v734, 1
      %v736 = vmax.f32 %v734, %v735
      %v737 = vmul.f32 %v340, %v309
      %v738 = vmul.f32 %v384, %v309
      %v739 = vmul.f32 %v428, %v309
      %v740 = vmul.f32 %v472, %v309
      %v741 = vmul.f32 %v560, %v309
      %v742 = vmul.f32 %v736, %v309
      %v743 = vsub.f32 %v203, %v96
      %v744 = vmul.f32 %v743, 1.442695
      %v745 = vpow.pop %v744
      %v746 = vmul.f32 %v745, %v309
      %v747 = vsub.f32 %v251, %v96
      %v748 = vmul.f32 %v747, 1.442695
      %v749 = vpow.pop %v748
      %v750 = vmul.f32 %v749, %v309
      %vm751 = vcmp.lt.f32.partialorder %v746, 0.01
      %v752 = vsel %vm751, 1, 0
      %v753 = vmul.u32 %v752, %v155
      %v754 = vsub.s32 1, %v752
      %v755 = vmul.u32 %v754, %v78
      %v756 = vadd.s32 %v753, %v755
      %vm757 = vcmp.eq.s32.totalorder %v752, 1
      %v758 = vsel %vm757, %v96, %v203
      %v759 = vlog2.pop %v308
      %v760 = vmul.f32 %v759, 0.6931472
      %v761 = vadd.f32 %v760, %v96
      %v762 = vsub.f32 %v761, %v758
      %v763 = vrcp.pop %v737
      %v764 = vmul.f32 %v309, %v763
      %v765 = vrcp.pop %v742
      %v766 = vmul.f32 %v737, %v765
      %vm767 = vcmp.gt.f32.partialorder %v764, %v766
      %vm768 = vcmp.lt.f32.partialorder %v746, %v738
      %vm769 = vmand %vm767, %vm768
      %v770 = vsel %vm769, 1, 0
      %vm771 = vcmp.eq.s32.totalorder %v155, %v78
      %v772 = vsel %vm771, 1, 0
      %vm773 = vcmp.eq.s32.totalorder %v155, %v207
      %v774 = vsel %vm773, 1, 0
      %v775 = vmul.u32 %v752, %v770
      %v776 = vmul.u32 %v754, %v772
      %v777 = vadd.s32 %v775, %v776
      %v778 = vmul.u32 %v774, %v777
      %vm779 = vcmp.ge.f32.partialorder %v750, %v742
      %s780 = smul.addr %s59, 8
      %s781 = scalar_lea.vmem [#allocation7], %s780
      %782 = vst [vmem:[%s781] sm:$0x1] %v309
      %783 = vst [vmem:[%s781 + $0x1] sm:$0x1] %v737
      %784 = vst [vmem:[%s781 + $0x2] sm:$0x1] %v738
      %785 = vst [vmem:[%s781 + $0x3] sm:$0x1] %v739
      %786 = vst [vmem:[%s781 + $0x4] sm:$0x1] %v740
      %787 = vst [vmem:[%s781 + $0x5] sm:$0x1] %v741
      %788 = vst [vmem:[%s781 + $0x6] sm:$0x1] %v742
      %789 = vst [vmem:[%s781 + $0x7] sm:$0x1] %v746
      %790 = vst [vmem:[%s781 + $0x10] sm:$0x1] %v750
      %791 = vst [vmem:[%s781 + $0x11] sm:$0x1] %v762
      %v792 = vcvt.s32.f32 %v155
      %793 = vst [vmem:[%s781 + $0x12] sm:$0x1] %v792
      %v794 = vcvt.s32.f32 %v752
      %795 = vst [vmem:[%s781 + $0x13] sm:$0x1] %v794
      %v796 = vcvt.s32.f32 %v756
      %797 = vst [vmem:[%s781 + $0x14] sm:$0x1] %v796
      %v798 = vcvt.s32.f32 %v778
      %799 = vst [vmem:[%s781 + $0x15] sm:$0x1] %v798
      %v800 = vcvt.s32.f32 %v777
      %801 = vst [vmem:[%s781 + $0x16] sm:$0x1] %v800
      %v802 = vsel %vm779, 1, 0
      %v803 = vcvt.s32.f32 %v802
      %804 = vst [vmem:[%s781 + $0x17] sm:$0x1] %v803
    $region22: #{tpu_custom_call.1} parent=1 // loop_footer
      %s57 = sadd.s32 1, %s53
    $region23: #{tpu_custom_call.1} parent=1 // loop_footer_branch
      %52 = sbr.rel target = $region19
    $region24: #{tpu_custom_call.1} parent=1 // loop_exit
      _
    // Predicated region
    $region25: #{tpu_custom_call.1} parent=1 // pred_check
      _
    $region26: #{tpu_custom_call.1} parent=1 // pred_check_branch
      %806 = sbr.rel (0) target = $region28
    $region27: #{tpu_custom_call.1} parent=1 // pred_region
      %s808 = ssub.s32 512, 512
      %809 = vsyncadd [#allocation4], %s808
      %s810 = sshll.u32 [#allocation7], 4
      %s811 = int_to_ptr.vmem [resolvable:$true] %s810
      %816 = dma.vmem_to_hbm [thread:$0]  %s811, 512, %s2, [#allocation4], 256, 256, 16
    $region28: #{tpu_custom_call.1} parent=1 // pred_fallthru
      _
    // Predicated region
    $region29: #{tpu_custom_call.1} parent=1 // pred_check
      _
    $region30: #{tpu_custom_call.1} parent=1 // pred_check_branch
      %818 = sbr.rel (0) target = $region32
    $region31: #{tpu_custom_call.1} parent=1 // pred_region
      %819 = dma.done [#allocation4], 512
    $region32: #{tpu_custom_call.1} parent=1 // pred_fallthru
      _
    %820 = vsyncpa [#allocation3], 1
    %821 = vsyncpa [#allocation6], 1
    %822 = vsyncpa [#allocation4], 1

</llo_original>
